<compile_context>
chip_gen: v7x
topology: tpu7x:2x2x1
jax: 0.10.0
libtpu: 0.0.40
codegen_flags: <defaults>
</compile_context>

<pallas_src>
import functools

import jax
import jax.numpy as jnp
from jax.experimental import pallas as pl
from jax.experimental.pallas import tpu as pltpu


CP = 128  # lane-padded class/output width


def _round_up(x, m):
    return ((x + m - 1) // m) * m


def _appnp_kernel(adj_ref, z0r_ref, z0c_ref, out_ref, z_ref, acc_ref, *,
                  k_steps, alpha, tm, tk, n_pad, adj_resident):
    """One grid step of the APPNP propagation kernel.

    Grid = (K, n_pad // tm, n_pad // tk)
      axis 0 (kk): propagation step (sequential)
      axis 1 (i) : row (destination) tile of A_hat / Z
      axis 2 (j) : contraction (source) tile of A_hat / Z

    adj_ref : resident : [nj, n_pad, tk] bf16 pre-tiled A_hat (VMEM-resident)
              streaming: [tm, tk]        bf16 streamed A_hat tile
    z0r_ref : [tm, CP] f32  Z0 row tile (alpha blend)
    z0c_ref : [tk, CP] bf16 Z0 column tile (matmul RHS at kk == 0)
    out_ref : [tm, CP] f32  output tile (only written at the final kk)
    z_ref   : [2*n_pad, CP] bf16 persistent ping-pong propagation state
    acc_ref : [tm, CP] f32  per-row-tile matmul accumulator
    """
    kk = pl.program_id(0)
    i = pl.program_id(1)
    j = pl.program_id(2)
    nj = pl.num_programs(2)

    row0 = pl.multiple_of(i * tm, 128)
    col0 = pl.multiple_of(j * tk, 128)

    # A_hat tile (already symmetric-normalized, bf16).
    if adj_resident:
        a = adj_ref[j, pl.ds(row0, tm), :]
    else:
        a = adj_ref[...]

    # RHS tile: Z0 columns on the first step, previous Z state afterwards.
    # (The un-selected branch may read uninitialized scratch at kk == 0; it is
    # an in-bounds VMEM read and the select discards it.)
    read_off = ((kk + 1) & 1) * n_pad        # ping-pong read buffer
    z_prev = z_ref[pl.ds(pl.multiple_of(read_off + col0, 128), tk), :]
    zp = jnp.where(kk == 0, z0c_ref[...], z_prev)

    part = jnp.dot(a, zp, preferred_element_type=jnp.float32)

    @pl.when(j == 0)
    def _():
        acc_ref[...] = part

    @pl.when(j > 0)
    def _():
        acc_ref[...] += part

    @pl.when(j == nj - 1)
    def _fin():
        write_off = (kk & 1) * n_pad         # ping-pong write buffer
        z_new = alpha * z0r_ref[...] + (1.0 - alpha) * acc_ref[...]
        z_ref[pl.ds(pl.multiple_of(write_off + row0, 128), tm), :] = (
            z_new.astype(jnp.bfloat16))

        @pl.when(kk == k_steps - 1)
        def _():
            out_ref[...] = z_new


def dgl_appnp_net(adj, features, weight, *, k, alpha, tile=None,
                  force_streaming=False):
    """Forward pass of DglAPPNPNet.

    adj      : [N, N] dense adjacency, adj[dst, src] != 0 iff edge src -> dst
    features : [N, F]
    weight   : [C, F] (torch nn.Linear layout), bias=False, activation=None
    """
    n, f = features.shape
    c = weight.shape[0]
    assert c <= CP  # TODO(synk): tile the class dimension if num_classes > 128
    k = int(k)
    alpha = float(alpha)

    # ---- DGL APPNPConv symmetric normalization (degrees clamped >= 1),
    #      folded into A_hat in the wrapper (so the kernel streams A_hat). ----
    adj_f = adj.astype(jnp.float32)
    deg_dst = jnp.maximum(adj_f.sum(axis=1), 1.0)       # row sums
    deg_src = jnp.maximum(adj_f.sum(axis=0), 1.0)       # column sums
    a_hat = (deg_dst ** -0.5)[:, None] * adj_f * (deg_src ** -0.5)[None, :]

    # ---- project first: Z0 = H0 @ W^T (exact: no bias / no activation). ----
    z0 = features.astype(jnp.float32) @ weight.T.astype(jnp.float32)   # [N, C]

    if k == 0:          # APPNPConv with k=0 is the identity on features
        return z0

    # ---- tiling plan (all tiles are multiples of 128) ----
    n_pad = _round_up(n, 128)
    if tile is None:
        tile = 512 if n_pad > 1024 else n_pad
    tile = min(_round_up(int(tile), 128), n_pad)
    n_pad = _round_up(n_pad, tile)
    tm = tk = tile
    pad_n = n_pad - n
    ni = n_pad // tm
    nj = n_pad // tk

    a_hat_p = jnp.pad(a_hat, ((0, pad_n), (0, pad_n))).astype(jnp.bfloat16)
    z0_p = jnp.pad(z0, ((0, pad_n), (0, CP - c))).astype(jnp.float32)
    z0c_p = z0_p.astype(jnp.bfloat16)                   # bf16 copy for MXU RHS

    # ---- VMEM budget / adjacency residency decision ----
    try:
        vmem_cap = int(pltpu.get_tpu_info().vmem_capacity_bytes)
    except Exception:
        vmem_cap = 64 * 1024 * 1024                     # conservative fallback

    z_scratch_bytes = 2 * n_pad * CP * 2                # bf16 ping-pong Z
    acc_bytes = tm * CP * 4
    io_bytes = 2 * tm * CP * 4 + 2 * tk * CP * 2 + 2 * tm * CP * 4  # z0r/z0c/out
    fixed_bytes = z_scratch_bytes + acc_bytes + io_bytes + (2 << 20)

    adj_resident_bytes = 2 * n_pad * n_pad * 2          # worst case dbl-buffered
    adj_stream_bytes = 2 * tm * tk * 2

    adj_resident = (not force_streaming) and (
        fixed_bytes + adj_resident_bytes <= int(0.75 * vmem_cap))

    adj_bytes = adj_resident_bytes if adj_resident else adj_stream_bytes
    needed = fixed_bytes + adj_bytes + (8 << 20)
    vmem_limit = int(min(max(needed, 32 * 1024 * 1024), int(0.95 * vmem_cap)))

    if adj_resident:
        # Pre-tile columns so the kernel only uses leading-axis + sublane
        # slicing on the resident block: adj_res[j, r, c] = A_hat[r, j*tk + c].
        adj_in = a_hat_p.reshape(n_pad, nj, tk).transpose(1, 0, 2)
        adj_spec = pl.BlockSpec((nj, n_pad, tk), lambda kk, i, j: (0, 0, 0))
    else:
        adj_in = a_hat_p
        adj_spec = pl.BlockSpec((tm, tk), lambda kk, i, j: (i, j))

    last_k = k - 1
    grid = (k, ni, nj)

    kernel = functools.partial(
        _appnp_kernel, k_steps=k, alpha=alpha, tm=tm, tk=tk, n_pad=n_pad,
        adj_resident=adj_resident)

    out_p = pl.pallas_call(
        kernel,
        out_shape=jax.ShapeDtypeStruct((n_pad, CP), jnp.float32),
        grid_spec=pltpu.PrefetchScalarGridSpec(
            num_scalar_prefetch=0,
            grid=grid,
            in_specs=[
                adj_spec,
                # Z0 row tile (f32) for the alpha blend.
                pl.BlockSpec((tm, CP), lambda kk, i, j: (i, 0)),
                # Z0 column tile (bf16), only needed at kk == 0; pinned after.
                pl.BlockSpec((tk, CP),
                             lambda kk, i, j: (jnp.where(kk == 0, j, 0), 0)),
            ],
            # Output block index pinned to (0, 0) until the final kk phase so
            # no stale intermediate writebacks hit HBM.
            out_specs=pl.BlockSpec(
                (tm, CP), lambda kk, i, j: (jnp.where(kk == last_k, i, 0), 0)),
            scratch_shapes=[
                pltpu.VMEM((2 * n_pad, CP), jnp.bfloat16),   # Z ping-pong
                pltpu.VMEM((tm, CP), jnp.float32),           # row-tile accumulator
            ]),
        compiler_params=pltpu.CompilerParams(
            # All axes sequential: kk is a true dependence chain and all row
            # tiles share the persistent Z scratch.
            dimension_semantics=("arbitrary", "arbitrary", "arbitrary"),
            vmem_limit_bytes=vmem_limit),
    )(adj_in, z0_p, z0c_p)

    return out_p[:n, :c]


def _reference(adj, features, weight, k, alpha):
    adj_f = adj.astype(jnp.float32)
    deg_dst = jnp.maximum(adj_f.sum(axis=1), 1.0)
    deg_src = jnp.maximum(adj_f.sum(axis=0), 1.0)
    a_hat = (deg_dst ** -0.5)[:, None] * adj_f * (deg_src ** -0.5)[None, :]
    h = features
    for _ in range(k):
        h = (1.0 - alpha) * (a_hat @ h) + alpha * features
    return h @ weight.T


def _make_graph(key, n, f, c):
    k_adj, k_feat, k_w = jax.random.split(key, 3)
    rand = jax.random.uniform(k_adj, (n, n))
    adj = (rand < 0.1).astype(jnp.float32)
    adj = jnp.maximum(adj, adj.T)                            # symmetrize
    adj = jnp.maximum(adj, jnp.eye(n, dtype=jnp.float32))    # self loops
    features = jax.random.normal(k_feat, (n, f), dtype=jnp.float32)
    bound = 1.0 / (f ** 0.5)
    weight = jax.random.uniform(k_w, (c, f), minval=-bound, maxval=bound,
                                dtype=jnp.float32)
    return adj, features, weight


if __name__ == "__main__":
    key = jax.random.PRNGKey(0)
    k1, k2 = jax.random.split(key)

    # Test 1: small graph -> single tile, A_hat resident in VMEM.
    N, F, C, K, ALPHA = 64, 32, 8, 3, 0.1
    adj, feats, w = _make_graph(k1, N, F, C)
    out = jax.block_until_ready(dgl_appnp_net(adj, feats, w, k=K, alpha=ALPHA))
    ref = _reference(adj, feats, w, K, ALPHA)
    assert out.shape == (N, C)
    err = float(jnp.max(jnp.abs(out - ref)))
    assert err < 3e-2, f"test1 mismatch vs reference: max abs err {err}"

    # Test 2: forced multi-tile streaming path (exercises the accumulator over
    # contraction tiles, the ping-pong Z state and the pinned output index).
    N2, F2, C2, K2, ALPHA2 = 384, 48, 10, 4, 0.15
    adj2, feats2, w2 = _make_graph(k2, N2, F2, C2)
    out2 = jax.block_until_ready(
        dgl_appnp_net(adj2, feats2, w2, k=K2, alpha=ALPHA2,
                      tile=128, force_streaming=True))
    ref2 = _reference(adj2, feats2, w2, K2, ALPHA2)
    assert out2.shape == (N2, C2)
    err2 = float(jnp.max(jnp.abs(out2 - ref2)))
    assert err2 < 5e-2, f"test2 mismatch vs reference: max abs err {err2}"

    print("KERNEL_OK")
</pallas_src>

<mosaic_0001>
module attributes {stable_mosaic.version = 11 : i64} {
  func.func @_appnp_kernel(%arg0: i32, %arg1: i32, %arg2: i32, %arg3: memref<1x128x128xbf16, #tpu.memory_space<vmem>>, %arg4: memref<128x128xf32, #tpu.memory_space<vmem>>, %arg5: memref<128x128xbf16, #tpu.memory_space<vmem>>, %arg6: memref<128x128xf32, #tpu.memory_space<vmem>>, %arg7: memref<256x128xbf16, #tpu.memory_space<vmem>>, %arg8: memref<128x128xf32, #tpu.memory_space<vmem>>) attributes {dimension_semantics = [#tpu.dimension_semantics<arbitrary>, #tpu.dimension_semantics<arbitrary>, #tpu.dimension_semantics<arbitrary>], iteration_bounds = array<i64: 3, 1, 1>, scalar_prefetch = 0 : i64, scratch_operands = 2 : i64, tpu.core_type = #tpu.core_type<tc>, window_params = [{pipeline_mode = #tpu.pipeline_mode<synchronous>, transform_indices = @transform_0, window_bounds = array<i64: 1, 128, 128>}, {transform_indices = @transform_1, window_bounds = array<i64: 128, 128>}, {transform_indices = @transform_2, window_bounds = array<i64: 128, 128>}, {transform_indices = @transform_3, window_bounds = array<i64: 128, 128>}]} {
    %c128_i32 = arith.constant 128 : i32
    %0 = arith.muli %arg1, %c128_i32 : i32
    %1 = tpu.assume_multiple %0, 128 : i32
    %c128_i32_0 = arith.constant 128 : i32
    %2 = arith.muli %arg2, %c128_i32_0 : i32
    %3 = tpu.assume_multiple %2, 128 : i32
    %4 = arith.index_cast %arg2 : i32 to index
    %5 = arith.index_cast %1 : i32 to index
    %c0 = arith.constant 0 : index
    %6 = vector.load %arg3[%4, %5, %c0] : memref<1x128x128xbf16, #tpu.memory_space<vmem>>, vector<1x128x128xbf16>
    %7 = vector.shape_cast %6 : vector<1x128x128xbf16> to vector<128x128xbf16>
    %c1_i32 = arith.constant 1 : i32
    %8 = arith.addi %arg0, %c1_i32 : i32
    %c1_i32_1 = arith.constant 1 : i32
    %9 = arith.andi %8, %c1_i32_1 : i32
    %c128_i32_2 = arith.constant 128 : i32
    %10 = arith.muli %9, %c128_i32_2 : i32
    %11 = arith.addi %10, %3 : i32
    %12 = tpu.assume_multiple %11, 128 : i32
    %13 = arith.index_cast %12 : i32 to index
    %c0_3 = arith.constant 0 : index
    %14 = vector.load %arg7[%13, %c0_3] : memref<256x128xbf16, #tpu.memory_space<vmem>>, vector<128x128xbf16>
    %c0_i32 = arith.constant 0 : i32
    %15 = arith.cmpi eq, %arg0, %c0_i32 : i32
    %c0_4 = arith.constant 0 : index
    %c0_5 = arith.constant 0 : index
    %16 = vector.load %arg5[%c0_4, %c0_5] : memref<128x128xbf16, #tpu.memory_space<vmem>>, vector<128x128xbf16>
    %17 = arith.select %15, %16, %14 : vector<128x128xbf16>
    %cst = arith.constant dense<0.000000e+00> : vector<128x128xf32>
    %18 = tpu.matmul %7, %17, %cst {dimension_numbers = #tpu.dot_dimension_numbers<[1], [0], [0], [1], [0, 0, 1, 1], [], []>} : vector<128x128xbf16>, vector<128x128xbf16>, vector<128x128xf32> -> vector<128x128xf32>
    %c0_i32_6 = arith.constant 0 : i32
    %19 = arith.cmpi eq, %arg2, %c0_i32_6 : i32
    %20 = arith.extui %19 : i1 to i32
    %c0_i32_7 = arith.constant 0 : i32
    %21 = arith.cmpi ne, %20, %c0_i32_7 : i32
    scf.if %21 {
      %c0_12 = arith.constant 0 : index
      %c0_13 = arith.constant 0 : index
      %28 = vector.load %arg8[%c0_12, %c0_13] : memref<128x128xf32, #tpu.memory_space<vmem>>, vector<128x128xf32>
      tpu.vector_store %arg8[%c0_12, %c0_13], %18 {strides = array<i32>} : memref<128x128xf32, #tpu.memory_space<vmem>>, vector<128x128xf32>,
    } else {
    }
    %c0_i32_8 = arith.constant 0 : i32
    %22 = arith.cmpi sgt, %arg2, %c0_i32_8 : i32
    %23 = arith.extui %22 : i1 to i32
    %c0_i32_9 = arith.constant 0 : i32
    %24 = arith.cmpi ne, %23, %c0_i32_9 : i32
    scf.if %24 {
      %c0_12 = arith.constant 0 : index
      %c0_13 = arith.constant 0 : index
      %28 = vector.load %arg8[%c0_12, %c0_13] : memref<128x128xf32, #tpu.memory_space<vmem>>, vector<128x128xf32>
      %29 = arith.addf %28, %18 : vector<128x128xf32>
      %c0_14 = arith.constant 0 : index
      %c0_15 = arith.constant 0 : index
      %30 = vector.load %arg8[%c0_14, %c0_15] : memref<128x128xf32, #tpu.memory_space<vmem>>, vector<128x128xf32>
      tpu.vector_store %arg8[%c0_14, %c0_15], %29 {strides = array<i32>} : memref<128x128xf32, #tpu.memory_space<vmem>>, vector<128x128xf32>,
    } else {
    }
    %c0_i32_10 = arith.constant 0 : i32
    %25 = arith.cmpi eq, %arg2, %c0_i32_10 : i32
    %26 = arith.extui %25 : i1 to i32
    %c0_i32_11 = arith.constant 0 : i32
    %27 = arith.cmpi ne, %26, %c0_i32_11 : i32
    scf.if %27 {
      %c1_i32_12 = arith.constant 1 : i32
      %28 = arith.andi %arg0, %c1_i32_12 : i32
      %c128_i32_13 = arith.constant 128 : i32
      %29 = arith.muli %28, %c128_i32_13 : i32
      %c0_14 = arith.constant 0 : index
      %c0_15 = arith.constant 0 : index
      %30 = vector.load %arg4[%c0_14, %c0_15] : memref<128x128xf32, #tpu.memory_space<vmem>>, vector<128x128xf32>
      %cst_16 = arith.constant 1.000000e-01 : f32
      %31 = vector.broadcast %cst_16 : f32 to vector<128x128xf32>
      %32 = arith.mulf %31, %30 : vector<128x128xf32>
      %c0_17 = arith.constant 0 : index
      %c0_18 = arith.constant 0 : index
      %33 = vector.load %arg8[%c0_17, %c0_18] : memref<128x128xf32, #tpu.memory_space<vmem>>, vector<128x128xf32>
      %cst_19 = arith.constant 0.899999976 : f32
      %34 = vector.broadcast %cst_19 : f32 to vector<128x128xf32>
      %35 = arith.mulf %34, %33 : vector<128x128xf32>
      %36 = arith.addf %32, %35 : vector<128x128xf32>
      %37 = arith.truncf %36 : vector<128x128xf32> to vector<128x128xbf16>
      %38 = arith.addi %29, %1 : i32
      %39 = tpu.assume_multiple %38, 128 : i32
      %40 = arith.index_cast %39 : i32 to index
      %c0_20 = arith.constant 0 : index
      %41 = vector.load %arg7[%40, %c0_20] : memref<256x128xbf16, #tpu.memory_space<vmem>>, vector<128x128xbf16>
      tpu.vector_store %arg7[%40, %c0_20], %37 {strides = array<i32>} : memref<256x128xbf16, #tpu.memory_space<vmem>>, vector<128x128xbf16>,
      %c2_i32 = arith.constant 2 : i32
      %42 = arith.cmpi eq, %arg0, %c2_i32 : i32
      %43 = arith.extui %42 : i1 to i32
      %c0_i32_21 = arith.constant 0 : i32
      %44 = arith.cmpi ne, %43, %c0_i32_21 : i32
      scf.if %44 {
        %c0_22 = arith.constant 0 : index
        %c0_23 = arith.constant 0 : index
        %45 = vector.load %arg6[%c0_22, %c0_23] : memref<128x128xf32, #tpu.memory_space<vmem>>, vector<128x128xf32>
        tpu.vector_store %arg6[%c0_22, %c0_23], %36 {strides = array<i32>} : memref<128x128xf32, #tpu.memory_space<vmem>>, vector<128x128xf32>,
      } else {
      }
    } else {
    }
    return
  }
  func.func @transform_0(%arg0: i32, %arg1: i32, %arg2: i32) -> (i32, i32, i32) {
    %c0_i32 = arith.constant 0 : i32
    %c0_i32_0 = arith.constant 0 : i32
    %c0_i32_1 = arith.constant 0 : i32
    %c0_i32_2 = arith.constant 0 : i32
    return %c0_i32, %c0_i32_0, %c0_i32_1 : i32, i32, i32
  }
  func.func @transform_1(%arg0: i32, %arg1: i32, %arg2: i32) -> (i32, i32) {
    %c0_i32 = arith.constant 0 : i32
    %c0_i32_0 = arith.constant 0 : i32
    return %arg1, %c0_i32 : i32, i32
  }
  func.func @transform_2(%arg0: i32, %arg1: i32, %arg2: i32) -> (i32, i32) {
    %c0_i32 = arith.constant 0 : i32
    %0 = arith.cmpi eq, %arg0, %c0_i32 : i32
    %c0_i32_0 = arith.constant 0 : i32
    %1 = arith.select %0, %arg2, %c0_i32_0 : i32
    %c0_i32_1 = arith.constant 0 : i32
    %c0_i32_2 = arith.constant 0 : i32
    return %1, %c0_i32_1 : i32, i32
  }
  func.func @transform_3(%arg0: i32, %arg1: i32, %arg2: i32) -> (i32, i32) {
    %c2_i32 = arith.constant 2 : i32
    %0 = arith.cmpi eq, %arg0, %c2_i32 : i32
    %c0_i32 = arith.constant 0 : i32
    %1 = arith.select %0, %arg1, %c0_i32 : i32
    %c0_i32_0 = arith.constant 0 : i32
    %c0_i32_1 = arith.constant 0 : i32
    return %1, %c0_i32_0 : i32, i32
  }
}

</mosaic_0001>

<llo_original>
// kernel: tpu_custom_call.1
$region0: #{tpu_custom_call.1}
  #allocation0 [shape = 'u32[]', space=smem, size = 0x4, offset = 0x4, fixed_abs, tag = 'smem constant byte address 0x4 - core index']
  #allocation1 [shape = 'u32[144,128]{1,0:T(1,128)}', space=vmem, size = 0x12000, scoped, tag = 'internal scratch']
  #allocation2 [shape = 'bf16[256,128]{1,0:T(16,128)(2,1)}', space=vmem, size = 0x10000, scoped, tag = 'scratch operand']
  #allocation3 [shape = 'f32[128,128]{1,0:T(8,128)}', space=vmem, size = 0x10000, scoped, tag = 'scratch operand']
  %s0 = inlined_call_operand.hbm [shape: bf16[1,128,128], index: 0, kind: input, shape index: {}]
  %s1 = inlined_call_operand.hbm [shape: f32[128,128], index: 1, kind: input, shape index: {}]
  %s2 = inlined_call_operand.hbm [shape: bf16[128,128], index: 2, kind: input, shape index: {}]
  %s3 = inlined_call_operand.hbm [shape: f32[128,128], index: 3, kind: output, shape index: {}]
  %s4 = sld [smem:[#allocation0]]
  $region73: #{tpu_custom_call.1} parent=0
    _
  %s6 = ssub.s32 1, %s4
  %s7 = scalar_select 0, %s6, %s4
  $region1: #{tpu_custom_call.1} parent=0
    #allocation4 [shape = 'u8[32768]{0}', space=vmem, size = 0x8000, scoped, tag = 'input window, operand 0, single buffered']
    #allocation5 [shape = 's32[2]{0}', space=sflag, size = 0x8, scoped, tag = 'scoped memory for tpu_custom_call.1']
    #allocation6 [shape = 's32[2]{0}', space=sflag, size = 0x8, scoped, tag = 'scoped memory for tpu_custom_call.1']
    #allocation7 [shape = 'u8[65536]{0}', space=vmem, size = 0x10000, scoped, tag = 'input window, operand 1, single buffered']
    #allocation8 [shape = 's32[1]{0}', space=sflag, size = 0x4, scoped, tag = 'scoped memory for tpu_custom_call.1']
    #allocation9 [shape = 'u8[65536]{0}', space=vmem, size = 0x10000, scoped, tag = 'input window, operand 2']
    #allocation10 [shape = 'u8[131072]{0}', space=vmem, size = 0x20000, scoped, tag = 'output window, operand 0']
    %8 = vsyncpa [#allocation5], 0
    %9 = vsyncpa [#allocation8], 0
    %10 = vsyncpa [#allocation6], 0
    %s11 = scalar_lea.sflag [#allocation6], 1
    %12 = vsyncpa %s11, 0
    loop: start=0, step=1, limit=5
    $region2: #{tpu_custom_call.1} parent=1 // loop_pre_header
      _
    $region3: #{tpu_custom_call.1} parent=1 // loop_header
      %s14 = sphi 0, %s18
      %p15 = scmp.ge.s32.totalorder %s14, 5
      %s21 = sphi 0, %s40
      %s22 = sphi 0, %s36
      %s23 = sphi 0, %s32
      %s24 = sphi 0, %s21
      %s25 = sphi 0, %s22
      %s26 = sphi 0, %s23
      %s27 = sphi 0, %s24
      %s28 = sphi 0, %s25
      %s29 = sphi 0, %s26
      %s41 = sphi 0, %s41
      %s43 = sphi 0, %s41
      %s44 = sphi 0, %s43
      %s58 = sphi 0, %s44
      %s64 = sphi 0, %s66
      %s67 = sphi 0, %s64
      %s68 = sphi 0, %s67
      %s84 = sphi 0, %s68
      %s94 = sphi 0, %s96
      %s97 = sphi 0, %s94
      %s98 = sphi 0, %s97
      %s114 = sphi 0, %s98
      %s124 = sphi 0, %s126
      %s127 = sphi 0, %s124
      %s128 = sphi 0, %s127
      %s144 = sphi 0, %s128
    $region4: #{tpu_custom_call.1} parent=1 // loop_header_branch
      %17 = sbr.rel (%p15) target = $region8
    $region5: #{tpu_custom_call.1} parent=1 // loop_body
      %s19 = ssub.s32 %s14, 1
      %s20 = ssub.s32 %s14, 2
      %s30 = sadd.s32 1, %s23
      %p31 = scmp.ge.s32.totalorder %s30, 1
      %s32 = scalar_select %p31, 0, %s30
      %s33 = sadd.s32 1, %s22
      %s34 = scalar_select %p31, %s33, %s22
      %p35 = scmp.ge.s32.totalorder %s34, 1
      %s36 = scalar_select %p35, 0, %s34
      %s37 = sadd.s32 1, %s21
      %s38 = scalar_select %p35, %s37, %s21
      %p39 = scmp.ge.s32.totalorder %s38, 3
      %s40 = scalar_select %p39, 0, %s38
      %s42 = sadd.s32 %s41, 1
      %p45 = scmp.eq.s32.totalorder %s14, 2
      %p46 = scmp.ne.s32.totalorder %s41, %s43
      %p47 = scmp.eq.s32.totalorder %s14, 0
      %p48 = por %p46, %p47
      %p49 = scmp.ne.s32.totalorder %s41, %s43
      %p50 = scmp.eq.s32.totalorder %s19, 2
      %p51 = por %p49, %p50
      %p52 = scmp.ne.s32.totalorder %s43, %s44
      %p53 = scmp.eq.s32.totalorder %s19, 0
      %p54 = por %p52, %p53
      %p55 = scmp.ne.s32.totalorder %s43, %s44
      %p56 = scmp.eq.s32.totalorder %s20, 2
      %p57 = por %p55, %p56
      %p59 = scmp.ne.s32.totalorder %s44, %s58
      %p60 = scmp.eq.s32.totalorder %s20, 0
      %p61 = por %p59, %p60
      %s62 = ssub.s32 %s22, %s36
      %p63 = scmp.eq.s32.totalorder %s62, 0
      %s65 = sadd.s32 %s64, 1
      %s66 = scalar_select %p63, %s64, %s65
      %p69 = pneg %p63
      %p70 = scmp.eq.s32.totalorder %s14, 2
      %p71 = por %p69, %p70
      %p72 = scmp.ne.s32.totalorder %s64, %s67
      %p73 = scmp.eq.s32.totalorder %s14, 0
      %p74 = por %p72, %p73
      %p75 = scmp.ne.s32.totalorder %s64, %s67
      %p76 = scmp.eq.s32.totalorder %s19, 2
      %p77 = por %p75, %p76
      %p78 = scmp.ne.s32.totalorder %s67, %s68
      %p79 = scmp.eq.s32.totalorder %s19, 0
      %p80 = por %p78, %p79
      %p81 = scmp.ne.s32.totalorder %s67, %s68
      %p82 = scmp.eq.s32.totalorder %s20, 2
      %p83 = por %p81, %p82
      %p85 = scmp.ne.s32.totalorder %s68, %s84
      %p86 = scmp.eq.s32.totalorder %s20, 0
      %p87 = por %p85, %p86
      %p88 = scmp.eq.s32.totalorder %s21, 0
      %s89 = scalar_select %p88, %s23, 0
      %p90 = scmp.eq.s32.totalorder %s40, 0
      %s91 = scalar_select %p90, %s32, 0
      %s92 = ssub.s32 %s89, %s91
      %p93 = scmp.eq.s32.totalorder %s92, 0
      %s95 = sadd.s32 %s94, 1
      %s96 = scalar_select %p93, %s94, %s95
      %p99 = pneg %p93
      %p100 = scmp.eq.s32.totalorder %s14, 2
      %p101 = por %p99, %p100
      %p102 = scmp.ne.s32.totalorder %s94, %s97
      %p103 = scmp.eq.s32.totalorder %s14, 0
      %p104 = por %p102, %p103
      %p105 = scmp.ne.s32.totalorder %s94, %s97
      %p106 = scmp.eq.s32.totalorder %s19, 2
      %p107 = por %p105, %p106
      %p108 = scmp.ne.s32.totalorder %s97, %s98
      %p109 = scmp.eq.s32.totalorder %s19, 0
      %p110 = por %p108, %p109
      %p111 = scmp.ne.s32.totalorder %s97, %s98
      %p112 = scmp.eq.s32.totalorder %s20, 2
      %p113 = por %p111, %p112
      %p115 = scmp.ne.s32.totalorder %s98, %s114
      %p116 = scmp.eq.s32.totalorder %s20, 0
      %p117 = por %p115, %p116
      %p118 = scmp.eq.s32.totalorder %s21, 2
      %s119 = scalar_select %p118, %s22, 0
      %p120 = scmp.eq.s32.totalorder %s40, 2
      %s121 = scalar_select %p120, %s36, 0
      %s122 = ssub.s32 %s119, %s121
      %p123 = scmp.eq.s32.totalorder %s122, 0
      %s125 = sadd.s32 %s124, 1
      %s126 = scalar_select %p123, %s124, %s125
      %p129 = pneg %p123
      %p130 = scmp.eq.s32.totalorder %s14, 2
      %p131 = por %p129, %p130
      %p132 = scmp.ne.s32.totalorder %s124, %s127
      %p133 = scmp.eq.s32.totalorder %s14, 0
      %p134 = por %p132, %p133
      %p135 = scmp.ne.s32.totalorder %s124, %s127
      %p136 = scmp.eq.s32.totalorder %s19, 2
      %p137 = por %p135, %p136
      %p138 = scmp.ne.s32.totalorder %s127, %s128
      %p139 = scmp.eq.s32.totalorder %s19, 0
      %p140 = por %p138, %p139
      %p141 = scmp.ne.s32.totalorder %s127, %s128
      %p142 = scmp.eq.s32.totalorder %s20, 2
      %p143 = por %p141, %p142
      %p145 = scmp.ne.s32.totalorder %s128, %s144
      %p146 = scmp.eq.s32.totalorder %s20, 0
      %p147 = por %p145, %p146
      %p148 = scmp.le.s32.totalorder 1, %s14
      %p149 = scmp.lt.s32.totalorder %s14, 4
      %p150 = pnand %p148, %p149
      %p151 = pneg %p150
      // Predicated region
      $region9: #{tpu_custom_call.1} parent=5 // pred_check
        _
      $region10: #{tpu_custom_call.1} parent=5 // pred_check_branch
        %153 = sbr.rel (%p150) target = $region12
      $region11: #{tpu_custom_call.1} parent=5 // pred_region
        %s154 = ssub.s32 %s14, 1
        // Predicated region
        $region13: #{tpu_custom_call.1} parent=11 // pred_check
          %p155 = pneg %p54
        $region14: #{tpu_custom_call.1} parent=11 // pred_check_branch
          %157 = sbr.rel (%p155) target = $region16
        $region15: #{tpu_custom_call.1} parent=11 // pred_region
          %s159 = ssub.s32 1024, 1024
          %160 = vsyncadd [#allocation5], %s159
          %s161 = sshll.u32 [#allocation4], 4
          %s162 = int_to_ptr.vmem [resolvable:$true] %s161
          %167 = dma.hbm_to_vmem [thread:$0]  %s0, 1024, %s162, [#allocation5], 64, 64, 4
        $region16: #{tpu_custom_call.1} parent=11 // pred_fallthru
          _
        // Predicated region
        $region17: #{tpu_custom_call.1} parent=11 // pred_check
          %p168 = pneg %p80
        $region18: #{tpu_custom_call.1} parent=11 // pred_check_branch
          %170 = sbr.rel (%p168) target = $region20
        $region19: #{tpu_custom_call.1} parent=11 // pred_region
          %s171 = smul.u32 16, %s25
          %s173 = ssub.s32 2048, 2048
          %174 = vsyncadd [#allocation8], %s173
          %s175 = smul.addr %s171, 128
          %s176 = scalar_lea.hbm %s1, %s175
          %s177 = sshll.u32 [#allocation7], 4
          %s178 = int_to_ptr.vmem [resolvable:$true] %s177
          %183 = dma.hbm_to_vmem [thread:$0]  %s176, 2048, %s178, [#allocation8], 128, 128, 8
        $region20: #{tpu_custom_call.1} parent=11 // pred_fallthru
          _
      $region12: #{tpu_custom_call.1} parent=5 // pred_fallthru
        _
      %p184 = scmp.lt.s32.totalorder %s14, 3
      // Predicated region
      $region21: #{tpu_custom_call.1} parent=5 // pred_check
        %p185 = pneg %p184
      $region22: #{tpu_custom_call.1} parent=5 // pred_check_branch
        %187 = sbr.rel (%p185) target = $region24
      $region23: #{tpu_custom_call.1} parent=5 // pred_region
        // Predicated region
        $region25: #{tpu_custom_call.1} parent=23 // pred_check
          %p188 = pneg %p104
        $region26: #{tpu_custom_call.1} parent=23 // pred_check_branch
          %190 = sbr.rel (%p188) target = $region28
        $region27: #{tpu_custom_call.1} parent=23 // pred_region
          %s191 = sand.u32 %s14, 1
          %s192 = scalar_lea.sflag [#allocation5], %s191
          %s193 = sand.u32 %s94, 1
          %s194 = smul.addr %s193, 64
          %s195 = scalar_lea.vmem [#allocation9], %s194
          %p196 = scmp.eq.s32.totalorder %s21, 0
          %s197 = scalar_select %p196, %s23, 0
          %s198 = smul.u32 16, %s197
          %s200 = ssub.s32 1024, 1024
          %201 = vsyncadd %s192, %s200
          %s202 = smul.addr %s198, 64
          %s203 = scalar_lea.hbm %s2, %s202
          %s204 = sshll.u32 %s195, 4
          %s205 = int_to_ptr.vmem [resolvable:$true] %s204
          %210 = dma.hbm_to_vmem [thread:$0]  %s203, 1024, %s205, %s192, 64, 64, 4
        $region28: #{tpu_custom_call.1} parent=23 // pred_fallthru
          _
      $region24: #{tpu_custom_call.1} parent=5 // pred_fallthru
        _
      %p211 = scmp.le.s32.totalorder 1, %s14
      %p212 = scmp.lt.s32.totalorder %s14, 4
      %p213 = pnand %p211, %p212
      %p214 = pneg %p213
      // Predicated region
      $region29: #{tpu_custom_call.1} parent=5 // pred_check
        _
      $region30: #{tpu_custom_call.1} parent=5 // pred_check_branch
        %216 = sbr.rel (%p213) target = $region32
      $region31: #{tpu_custom_call.1} parent=5 // pred_region
        %s217 = ssub.s32 %s14, 1
        // Predicated region
        $region33: #{tpu_custom_call.1} parent=31 // pred_check
          %p218 = pneg %p54
        $region34: #{tpu_custom_call.1} parent=31 // pred_check_branch
          %220 = sbr.rel (%p218) target = $region36
        $region35: #{tpu_custom_call.1} parent=31 // pred_region
          %221 = dma.done [#allocation5], 1024
        $region36: #{tpu_custom_call.1} parent=31 // pred_fallthru
          _
        // Predicated region
        $region37: #{tpu_custom_call.1} parent=31 // pred_check
          %p222 = pneg %p80
        $region38: #{tpu_custom_call.1} parent=31 // pred_check_branch
          %224 = sbr.rel (%p222) target = $region40
        $region39: #{tpu_custom_call.1} parent=31 // pred_region
          %225 = dma.done [#allocation8], 2048
        $region40: #{tpu_custom_call.1} parent=31 // pred_fallthru
          _
        %s226 = sand.u32 %s19, 1
        %s227 = scalar_lea.sflag [#allocation5], %s226
        %s228 = sand.u32 %s97, 1
        %s229 = smul.addr %s228, 64
        %s230 = scalar_lea.vmem [#allocation9], %s229
        // Predicated region
        $region41: #{tpu_custom_call.1} parent=31 // pred_check
          %p231 = pneg %p110
        $region42: #{tpu_custom_call.1} parent=31 // pred_check_branch
          %233 = sbr.rel (%p231) target = $region44
        $region43: #{tpu_custom_call.1} parent=31 // pred_region
          %234 = dma.done %s227, 1024
        $region44: #{tpu_custom_call.1} parent=31 // pred_fallthru
          _
        %p235 = pneg %p54
        %p236 = pneg %p51
        %p237 = pneg %p80
        %p238 = pneg %p77
        %s239 = sand.u32 %s19, 1
        %s240 = scalar_lea.sflag [#allocation5], %s239
        %s241 = sand.u32 %s97, 1
        %s242 = smul.addr %s241, 64
        %s243 = scalar_lea.vmem [#allocation9], %s242
        %p244 = pneg %p110
        %p245 = pneg %p107
        %p246 = pneg %p140
        %p247 = pneg %p137
        %s248 = sand.u32 %s127, 1
        %s249 = scalar_lea.sflag [#allocation6], %s248
        %s250 = sand.u32 %s127, 1
        %s251 = smul.addr %s250, 128
        %s252 = scalar_lea.vmem [#allocation10], %s251
        %s253 = smul.u32 16, %s25
        %p254 = scmp.eq.s32.totalorder %s24, 0
        %s255 = scalar_select %p254, %s26, 0
        %s256 = smul.u32 16, %s255
        %p257 = scmp.eq.s32.totalorder %s24, 2
        %s258 = scalar_select %p257, %s25, 0
        %s259 = smul.u32 16, %s258
        %s261 = smul.u32 %s25, 128
        %s262 = smul.u32 %s26, 128
        %s263 = sshra.s32 %s261, 3
        %s264 = sand.u32 %s261, 7
        %s265 = smul.u32 %s26, 16
        %s266 = sadd.s32 %s263, %s265
        %s267 = smul.addr %s266, 4
        %s268 = scalar_lea.vmem [#allocation4], %s267
        %v269 = vld [vmem:[%s268] sm:$0xf]
        %v270 = vld [vmem:[%s268 + $0x4] sm:$0xf]
        %v271 = vld [vmem:[%s268 + $0x8] sm:$0xf]
        %v272 = vld [vmem:[%s268 + $0xc] sm:$0xf]
        %v273 = vld [vmem:[%s268 + $0x10] sm:$0xf]
        %v274 = vld [vmem:[%s268 + $0x14] sm:$0xf]
        %v275 = vld [vmem:[%s268 + $0x18] sm:$0xf]
        %v276 = vld [vmem:[%s268 + $0x1c] sm:$0xf]
        %v277 = vld [vmem:[%s268 + $0x20] sm:$0xf]
        %v278 = vld [vmem:[%s268 + $0x24] sm:$0xf]
        %v279 = vld [vmem:[%s268 + $0x28] sm:$0xf]
        %v280 = vld [vmem:[%s268 + $0x2c] sm:$0xf]
        %v281 = vld [vmem:[%s268 + $0x30] sm:$0xf]
        %v282 = vld [vmem:[%s268 + $0x34] sm:$0xf]
        %v283 = vld [vmem:[%s268 + $0x38] sm:$0xf]
        %v284 = vld [vmem:[%s268 + $0x3c] sm:$0xf]
        %s285 = sadd.s32 %s24, 1
        %s286 = sand.u32 %s285, 1
        %s287 = smul.u32 %s286, 128
        %s288 = sadd.s32 %s287, %s262
        %s289 = sshra.s32 %s288, 4
        %s290 = sand.u32 %s288, 15
        %s291 = smul.addr %s289, 8
        %s292 = scalar_lea.vmem [#allocation2], %s291
        %v293 = vld [vmem:[%s292] sm:$0xff]
        %v294 = vld [vmem:[%s292 + $0x8] sm:$0xff]
        %v295 = vld [vmem:[%s292 + $0x10] sm:$0xff]
        %v296 = vld [vmem:[%s292 + $0x18] sm:$0xff]
        %v297 = vld [vmem:[%s292 + $0x20] sm:$0xff]
        %v298 = vld [vmem:[%s292 + $0x28] sm:$0xff]
        %v299 = vld [vmem:[%s292 + $0x30] sm:$0xff]
        %v300 = vld [vmem:[%s292 + $0x38] sm:$0xff]
        %p301 = scmp.eq.s32.totalorder %s24, 0
        %v302 = vld [vmem:[%s230] sm:$0xf]
        %v303 = vld [vmem:[%s230 + $0x4] sm:$0xf]
        %v304 = vld [vmem:[%s230 + $0x8] sm:$0xf]
        %v305 = vld [vmem:[%s230 + $0xc] sm:$0xf]
        %v306 = vld [vmem:[%s230 + $0x10] sm:$0xf]
        %v307 = vld [vmem:[%s230 + $0x14] sm:$0xf]
        %v308 = vld [vmem:[%s230 + $0x18] sm:$0xf]
        %v309 = vld [vmem:[%s230 + $0x1c] sm:$0xf]
        %v310 = vld [vmem:[%s230 + $0x20] sm:$0xf]
        %v311 = vld [vmem:[%s230 + $0x24] sm:$0xf]
        %v312 = vld [vmem:[%s230 + $0x28] sm:$0xf]
        %v313 = vld [vmem:[%s230 + $0x2c] sm:$0xf]
        %v314 = vld [vmem:[%s230 + $0x30] sm:$0xf]
        %v315 = vld [vmem:[%s230 + $0x34] sm:$0xf]
        %v316 = vld [vmem:[%s230 + $0x38] sm:$0xf]
        %v317 = vld [vmem:[%s230 + $0x3c] sm:$0xf]
        %s318 = scalar_select %p301, 1, 0
        %v319 = vstv %s318
        %vm320 = vcmp.eq.s32.totalorder %v319, 1
        %v329 = vunpack.c.l.b16 %v293
        %v330 = vunpack.c.h.b16 %v293
        %v331 = vunpack.c.l.b16 %v294
        %v332 = vunpack.c.h.b16 %v294
        %v333 = vunpack.c.l.b16 %v295
        %v334 = vunpack.c.h.b16 %v295
        %v335 = vunpack.c.l.b16 %v296
        %v336 = vunpack.c.h.b16 %v296
        %v337 = vunpack.c.l.b16 %v297
        %v338 = vunpack.c.h.b16 %v297
        %v339 = vunpack.c.l.b16 %v298
        %v340 = vunpack.c.h.b16 %v298
        %v341 = vunpack.c.l.b16 %v299
        %v342 = vunpack.c.h.b16 %v299
        %v343 = vunpack.c.l.b16 %v300
        %v344 = vunpack.c.h.b16 %v300
        %v345 = vpack.c.b16 %v329, %v329
        %v346 = vpack.c.b16 %v330, %v330
        %v347 = vpack.c.b16 %v331, %v331
        %v348 = vpack.c.b16 %v332, %v332
        %v349 = vpack.c.b16 %v333, %v333
        %v350 = vpack.c.b16 %v334, %v334
        %v351 = vpack.c.b16 %v335, %v335
        %v352 = vpack.c.b16 %v336, %v336
        %v353 = vpack.c.b16 %v337, %v337
        %v354 = vpack.c.b16 %v338, %v338
        %v355 = vpack.c.b16 %v339, %v339
        %v356 = vpack.c.b16 %v340, %v340
        %v357 = vpack.c.b16 %v341, %v341
        %v358 = vpack.c.b16 %v342, %v342
        %v359 = vpack.c.b16 %v343, %v343
        %v360 = vpack.c.b16 %v344, %v344
        %v377 = vsel %vm320, %v302, %v345
        %v378 = vsel %vm320, %v303, %v346
        %v379 = vsel %vm320, %v304, %v347
        %v380 = vsel %vm320, %v305, %v348
        %v381 = vsel %vm320, %v306, %v349
        %v382 = vsel %vm320, %v307, %v350
        %v383 = vsel %vm320, %v308, %v351
        %v384 = vsel %vm320, %v309, %v352
        %v385 = vsel %vm320, %v310, %v353
        %v386 = vsel %vm320, %v311, %v354
        %v387 = vsel %vm320, %v312, %v355
        %v388 = vsel %vm320, %v313, %v356
        %v389 = vsel %vm320, %v314, %v357
        %v390 = vsel %vm320, %v315, %v358
        %v391 = vsel %vm320, %v316, %v359
        %v392 = vsel %vm320, %v317, %v360
        %v409 = vunpack.c.l.b16 %v269
        %v410 = vunpack.c.l.b16 %v270
        %v411 = vunpack.c.l.b16 %v271
        %v412 = vunpack.c.l.b16 %v272
        %v413 = vunpack.c.l.b16 %v273
        %v414 = vunpack.c.l.b16 %v274
        %v415 = vunpack.c.l.b16 %v275
        %v416 = vunpack.c.l.b16 %v276
        %v417 = vunpack.c.l.b16 %v277
        %v418 = vunpack.c.l.b16 %v278
        %v419 = vunpack.c.l.b16 %v279
        %v420 = vunpack.c.l.b16 %v280
        %v421 = vunpack.c.l.b16 %v281
        %v422 = vunpack.c.l.b16 %v282
        %v423 = vunpack.c.l.b16 %v283
        %v424 = vunpack.c.l.b16 %v284
        %v425 = vpack.c.b16 %v410, %v409
        %v426 = vpack.c.b16 %v412, %v411
        %v427 = vpack.c.b16 %v414, %v413
        %v428 = vpack.c.b16 %v416, %v415
        %v429 = vpack.c.b16 %v418, %v417
        %v430 = vpack.c.b16 %v420, %v419
        %v431 = vpack.c.b16 %v422, %v421
        %v432 = vpack.c.b16 %v424, %v423
        %v457 = vunpack.c.l.b16 %v377
        %v458 = vunpack.c.l.b16 %v378
        %v459 = vunpack.c.l.b16 %v379
        %v460 = vunpack.c.l.b16 %v380
        %v461 = vunpack.c.l.b16 %v381
        %v462 = vunpack.c.l.b16 %v382
        %v463 = vunpack.c.l.b16 %v383
        %v464 = vunpack.c.l.b16 %v384
        %v465 = vunpack.c.l.b16 %v385
        %v466 = vunpack.c.l.b16 %v386
        %v467 = vunpack.c.l.b16 %v387
        %v468 = vunpack.c.l.b16 %v388
        %v469 = vunpack.c.l.b16 %v389
        %v470 = vunpack.c.l.b16 %v390
        %v471 = vunpack.c.l.b16 %v391
        %v472 = vunpack.c.l.b16 %v392
        %v473 = vpack.c.b16 %v458, %v457
        %v474 = vpack.c.b16 %v460, %v459
        %v475 = vpack.c.b16 %v462, %v461
        %v476 = vpack.c.b16 %v464, %v463
        %v477 = vpack.c.b16 %v466, %v465
        %v478 = vpack.c.b16 %v468, %v467
        %v479 = vpack.c.b16 %v470, %v469
        %v480 = vpack.c.b16 %v472, %v471
        %489 = vmatprep.subr.bf16.mxu0 0
        %490 = vmatpush1.bf16.msra.mxu0 %v473
        %491 = vmatprep.subr.bf16.mxu0 0
        %492 = vmatpush1.bf16.msra.mxu0 %v474
        %493 = vmatprep.subr.bf16.mxu0 0
        %494 = vmatpush1.bf16.msra.mxu0 %v475
        %495 = vmatprep.subr.bf16.mxu0 0
        %496 = vmatpush1.bf16.msra.mxu0 %v476
        %497 = vmatprep.subr.bf16.mxu0 0
        %498 = vmatpush1.bf16.msra.mxu0 %v477
        %499 = vmatprep.subr.bf16.mxu0 0
        %500 = vmatpush1.bf16.msra.mxu0 %v478
        %501 = vmatprep.subr.bf16.mxu0 0
        %502 = vmatpush1.bf16.msra.mxu0 %v479
        %503 = vmatprep.subr.bf16.mxu0 0
        %504 = vmatpush1.bf16.msra.mxu0 %v480
        %505 = vmatprep.subr.bf16.mxu0 0
        %506 = vmatpush1.bf16.msra.mxu0 0
        %507 = vmatprep.subr.bf16.mxu0 0
        %508 = vmatpush1.bf16.msra.mxu0 0
        %509 = vmatprep.subr.bf16.mxu0 0
        %510 = vmatpush1.bf16.msra.mxu0 0
        %511 = vmatprep.subr.bf16.mxu0 0
        %512 = vmatpush1.bf16.msra.mxu0 0
        %513 = vmatprep.subr.bf16.mxu0 0
        %514 = vmatpush1.bf16.msra.mxu0 0
        %515 = vmatprep.subr.bf16.mxu0 0
        %516 = vmatpush1.bf16.msra.mxu0 0
        %517 = vmatprep.subr.bf16.mxu0 0
        %518 = vmatpush1.bf16.msra.mxu0 0
        %519 = vmatprep.subr.bf16.mxu0 0
        %520 = vmatpush1.bf16.msra.mxu0 0
        %521 = vmatprep.mubr.bf16.mxu0 0
        %522 = vmatmul.mubr.bf16.gmra.mrb[0].mxu0 %v425
        %v523 = vpop.f32.mrb[0].mxu0
        %v524 = vadd.f32 0.0, %v523
        %v525 = vpop.f32.mrb[0].mxu0
        %v526 = vpop.f32.mrb[0].mxu0
        %v527 = vadd.f32 0.0, %v526
        %v528 = vpop.f32.mrb[0].mxu0
        %529 = vmatprep.mubr.bf16.mxu0 0
        %530 = vmatmul.mubr.bf16.gmra.mrb[0].mxu0 %v426
        %v531 = vpop.f32.mrb[0].mxu0
        %v532 = vadd.f32 0.0, %v531
        %v533 = vpop.f32.mrb[0].mxu0
        %v534 = vpop.f32.mrb[0].mxu0
        %v535 = vadd.f32 0.0, %v534
        %v536 = vpop.f32.mrb[0].mxu0
        %537 = vmatprep.mubr.bf16.mxu0 0
        %538 = vmatmul.mubr.bf16.gmra.mrb[0].mxu0 %v427
        %v539 = vpop.f32.mrb[0].mxu0
        %v540 = vadd.f32 0.0, %v539
        %v541 = vpop.f32.mrb[0].mxu0
        %v542 = vpop.f32.mrb[0].mxu0
        %v543 = vadd.f32 0.0, %v542
        %v544 = vpop.f32.mrb[0].mxu0
        %545 = vmatprep.mubr.bf16.mxu0 0
        %546 = vmatmul.mubr.bf16.gmra.mrb[0].mxu0 %v428
        %v547 = vpop.f32.mrb[0].mxu0
        %v548 = vadd.f32 0.0, %v547
        %v549 = vpop.f32.mrb[0].mxu0
        %v550 = vpop.f32.mrb[0].mxu0
        %v551 = vadd.f32 0.0, %v550
        %v552 = vpop.f32.mrb[0].mxu0
        %553 = vmatprep.mubr.bf16.mxu0 0
        %554 = vmatmul.mubr.bf16.gmra.mrb[0].mxu0 %v429
        %v555 = vpop.f32.mrb[0].mxu0
        %v556 = vadd.f32 0.0, %v555
        %v557 = vpop.f32.mrb[0].mxu0
        %v558 = vpop.f32.mrb[0].mxu0
        %v559 = vadd.f32 0.0, %v558
        %v560 = vpop.f32.mrb[0].mxu0
        %561 = vmatprep.mubr.bf16.mxu0 0
        %562 = vmatmul.mubr.bf16.gmra.mrb[0].mxu0 %v430
        %v563 = vpop.f32.mrb[0].mxu0
        %v564 = vadd.f32 0.0, %v563
        %v565 = vpop.f32.mrb[0].mxu0
        %v566 = vpop.f32.mrb[0].mxu0
        %v567 = vadd.f32 0.0, %v566
        %v568 = vpop.f32.mrb[0].mxu0
        %569 = vmatprep.mubr.bf16.mxu0 0
        %570 = vmatmul.mubr.bf16.gmra.mrb[0].mxu0 %v431
        %v571 = vpop.f32.mrb[0].mxu0
        %v572 = vadd.f32 0.0, %v571
        %v573 = vpop.f32.mrb[0].mxu0
        %v574 = vpop.f32.mrb[0].mxu0
        %v575 = vadd.f32 0.0, %v574
        %v576 = vpop.f32.mrb[0].mxu0
        %577 = vmatprep.mubr.bf16.mxu0 0
        %578 = vmatmul.mubr.bf16.gmra.mrb[0].mxu0 %v432
        %v579 = vpop.f32.mrb[0].mxu0
        %v580 = vadd.f32 0.0, %v579
        %v581 = vpop.f32.mrb[0].mxu0
        %v582 = vpop.f32.mrb[0].mxu0
        %v583 = vadd.f32 0.0, %v582
        %v584 = vpop.f32.mrb[0].mxu0
        %585 = vdwg.mxu0
        %p586 = scmp.eq.s32.totalorder %s26, 0
        // Predicated region
        $region45: #{tpu_custom_call.1} parent=31 // pred_check
          %p587 = pneg %p586
        $region46: #{tpu_custom_call.1} parent=31 // pred_check_branch
          %589 = sbr.rel (%p587) target = $region48
        $region47: #{tpu_custom_call.1} parent=31 // pred_region
          %590 = vst [vmem:[#allocation3] sm:$0xff] %v524
          %591 = vst [vmem:[#allocation3 + $0x8] sm:$0xff] %v527
          %592 = vst [vmem:[#allocation3 + $0x10] sm:$0xff] %v532
          %593 = vst [vmem:[#allocation3 + $0x18] sm:$0xff] %v535
          %594 = vst [vmem:[#allocation3 + $0x20] sm:$0xff] %v540
          %595 = vst [vmem:[#allocation3 + $0x28] sm:$0xff] %v543
          %596 = vst [vmem:[#allocation3 + $0x30] sm:$0xff] %v548
          %597 = vst [vmem:[#allocation3 + $0x38] sm:$0xff] %v551
          %598 = vst [vmem:[#allocation3 + $0x40] sm:$0xff] %v556
          %599 = vst [vmem:[#allocation3 + $0x48] sm:$0xff] %v559
          %600 = vst [vmem:[#allocation3 + $0x50] sm:$0xff] %v564
          %601 = vst [vmem:[#allocation3 + $0x58] sm:$0xff] %v567
          %602 = vst [vmem:[#allocation3 + $0x60] sm:$0xff] %v572
          %603 = vst [vmem:[#allocation3 + $0x68] sm:$0xff] %v575
          %604 = vst [vmem:[#allocation3 + $0x70] sm:$0xff] %v580
          %605 = vst [vmem:[#allocation3 + $0x78] sm:$0xff] %v583
        $region48: #{tpu_custom_call.1} parent=31 // pred_fallthru
          _
        %p606 = scmp.gt.s32.totalorder %s26, 0
        // Predicated region
        $region49: #{tpu_custom_call.1} parent=31 // pred_check
          %p607 = pneg %p606
        $region50: #{tpu_custom_call.1} parent=31 // pred_check_branch
          %609 = sbr.rel (%p607) target = $region52
        $region51: #{tpu_custom_call.1} parent=31 // pred_region
          %v610 = vld [vmem:[#allocation3] sm:$0xff]
          %v611 = vld [vmem:[#allocation3 + $0x8] sm:$0xff]
          %v612 = vld [vmem:[#allocation3 + $0x10] sm:$0xff]
          %v613 = vld [vmem:[#allocation3 + $0x18] sm:$0xff]
          %v614 = vld [vmem:[#allocation3 + $0x20] sm:$0xff]
          %v615 = vld [vmem:[#allocation3 + $0x28] sm:$0xff]
          %v616 = vld [vmem:[#allocation3 + $0x30] sm:$0xff]
          %v617 = vld [vmem:[#allocation3 + $0x38] sm:$0xff]
          %v618 = vld [vmem:[#allocation3 + $0x40] sm:$0xff]
          %v619 = vld [vmem:[#allocation3 + $0x48] sm:$0xff]
          %v620 = vld [vmem:[#allocation3 + $0x50] sm:$0xff]
          %v621 = vld [vmem:[#allocation3 + $0x58] sm:$0xff]
          %v622 = vld [vmem:[#allocation3 + $0x60] sm:$0xff]
          %v623 = vld [vmem:[#allocation3 + $0x68] sm:$0xff]
          %v624 = vld [vmem:[#allocation3 + $0x70] sm:$0xff]
          %v625 = vld [vmem:[#allocation3 + $0x78] sm:$0xff]
          %v626 = vadd.f32 %v610, %v524
          %v627 = vadd.f32 %v611, %v527
          %v628 = vadd.f32 %v612, %v532
          %v629 = vadd.f32 %v613, %v535
          %v630 = vadd.f32 %v614, %v540
          %v631 = vadd.f32 %v615, %v543
          %v632 = vadd.f32 %v616, %v548
          %v633 = vadd.f32 %v617, %v551
          %v634 = vadd.f32 %v618, %v556
          %v635 = vadd.f32 %v619, %v559
          %v636 = vadd.f32 %v620, %v564
          %v637 = vadd.f32 %v621, %v567
          %v638 = vadd.f32 %v622, %v572
          %v639 = vadd.f32 %v623, %v575
          %v640 = vadd.f32 %v624, %v580
          %v641 = vadd.f32 %v625, %v583
          %642 = vst [vmem:[#allocation3] sm:$0xff] %v626
          %643 = vst [vmem:[#allocation3 + $0x8] sm:$0xff] %v627
          %644 = vst [vmem:[#allocation3 + $0x10] sm:$0xff] %v628
          %645 = vst [vmem:[#allocation3 + $0x18] sm:$0xff] %v629
          %646 = vst [vmem:[#allocation3 + $0x20] sm:$0xff] %v630
          %647 = vst [vmem:[#allocation3 + $0x28] sm:$0xff] %v631
          %648 = vst [vmem:[#allocation3 + $0x30] sm:$0xff] %v632
          %649 = vst [vmem:[#allocation3 + $0x38] sm:$0xff] %v633
          %650 = vst [vmem:[#allocation3 + $0x40] sm:$0xff] %v634
          %651 = vst [vmem:[#allocation3 + $0x48] sm:$0xff] %v635
          %652 = vst [vmem:[#allocation3 + $0x50] sm:$0xff] %v636
          %653 = vst [vmem:[#allocation3 + $0x58] sm:$0xff] %v637
          %654 = vst [vmem:[#allocation3 + $0x60] sm:$0xff] %v638
          %655 = vst [vmem:[#allocation3 + $0x68] sm:$0xff] %v639
          %656 = vst [vmem:[#allocation3 + $0x70] sm:$0xff] %v640
          %657 = vst [vmem:[#allocation3 + $0x78] sm:$0xff] %v641
        $region52: #{tpu_custom_call.1} parent=31 // pred_fallthru
          _
        // Predicated region
        $region53: #{tpu_custom_call.1} parent=31 // pred_check
          %p658 = pneg %p586
        $region54: #{tpu_custom_call.1} parent=31 // pred_check_branch
          %660 = sbr.rel (%p658) target = $region56
        $region55: #{tpu_custom_call.1} parent=31 // pred_region
          %s661 = sand.u32 %s24, 1
          %s662 = smul.u32 %s661, 128
          %v663 = vld [vmem:[#allocation7] sm:$0xff]
          %v664 = vld [vmem:[#allocation7 + $0x8] sm:$0xff]
          %v665 = vld [vmem:[#allocation7 + $0x10] sm:$0xff]
          %v666 = vld [vmem:[#allocation7 + $0x18] sm:$0xff]
          %v667 = vld [vmem:[#allocation7 + $0x20] sm:$0xff]
          %v668 = vld [vmem:[#allocation7 + $0x28] sm:$0xff]
          %v669 = vld [vmem:[#allocation7 + $0x30] sm:$0xff]
          %v670 = vld [vmem:[#allocation7 + $0x38] sm:$0xff]
          %v671 = vld [vmem:[#allocation7 + $0x40] sm:$0xff]
          %v672 = vld [vmem:[#allocation7 + $0x48] sm:$0xff]
          %v673 = vld [vmem:[#allocation7 + $0x50] sm:$0xff]
          %v674 = vld [vmem:[#allocation7 + $0x58] sm:$0xff]
          %v675 = vld [vmem:[#allocation7 + $0x60] sm:$0xff]
          %v676 = vld [vmem:[#allocation7 + $0x68] sm:$0xff]
          %v677 = vld [vmem:[#allocation7 + $0x70] sm:$0xff]
          %v678 = vld [vmem:[#allocation7 + $0x78] sm:$0xff]
          %v679 = vmul.f32 %v663, 0.1
          %v680 = vmul.f32 %v664, 0.1
          %v681 = vmul.f32 %v665, 0.1
          %v682 = vmul.f32 %v666, 0.1
          %v683 = vmul.f32 %v667, 0.1
          %v684 = vmul.f32 %v668, 0.1
          %v685 = vmul.f32 %v669, 0.1
          %v686 = vmul.f32 %v670, 0.1
          %v687 = vmul.f32 %v671, 0.1
          %v688 = vmul.f32 %v672, 0.1
          %v689 = vmul.f32 %v673, 0.1
          %v690 = vmul.f32 %v674, 0.1
          %v691 = vmul.f32 %v675, 0.1
          %v692 = vmul.f32 %v676, 0.1
          %v693 = vmul.f32 %v677, 0.1
          %v694 = vmul.f32 %v678, 0.1
          %v695 = vld [vmem:[#allocation3] sm:$0xff]
          %v696 = vld [vmem:[#allocation3 + $0x8] sm:$0xff]
          %v697 = vld [vmem:[#allocation3 + $0x10] sm:$0xff]
          %v698 = vld [vmem:[#allocation3 + $0x18] sm:$0xff]
          %v699 = vld [vmem:[#allocation3 + $0x20] sm:$0xff]
          %v700 = vld [vmem:[#allocation3 + $0x28] sm:$0xff]
          %v701 = vld [vmem:[#allocation3 + $0x30] sm:$0xff]
          %v702 = vld [vmem:[#allocation3 + $0x38] sm:$0xff]
          %v703 = vld [vmem:[#allocation3 + $0x40] sm:$0xff]
          %v704 = vld [vmem:[#allocation3 + $0x48] sm:$0xff]
          %v705 = vld [vmem:[#allocation3 + $0x50] sm:$0xff]
          %v706 = vld [vmem:[#allocation3 + $0x58] sm:$0xff]
          %v707 = vld [vmem:[#allocation3 + $0x60] sm:$0xff]
          %v708 = vld [vmem:[#allocation3 + $0x68] sm:$0xff]
          %v709 = vld [vmem:[#allocation3 + $0x70] sm:$0xff]
          %v710 = vld [vmem:[#allocation3 + $0x78] sm:$0xff]
          %v711 = vmul.f32 %v695, 0.9
          %v712 = vmul.f32 %v696, 0.9
          %v713 = vmul.f32 %v697, 0.9
          %v714 = vmul.f32 %v698, 0.9
          %v715 = vmul.f32 %v699, 0.9
          %v716 = vmul.f32 %v700, 0.9
          %v717 = vmul.f32 %v701, 0.9
          %v718 = vmul.f32 %v702, 0.9
          %v719 = vmul.f32 %v703, 0.9
          %v720 = vmul.f32 %v704, 0.9
          %v721 = vmul.f32 %v705, 0.9
          %v722 = vmul.f32 %v706, 0.9
          %v723 = vmul.f32 %v707, 0.9
          %v724 = vmul.f32 %v708, 0.9
          %v725 = vmul.f32 %v709, 0.9
          %v726 = vmul.f32 %v710, 0.9
          %v727 = vadd.f32 %v679, %v711
          %v728 = vadd.f32 %v680, %v712
          %v729 = vadd.f32 %v681, %v713
          %v730 = vadd.f32 %v682, %v714
          %v731 = vadd.f32 %v683, %v715
          %v732 = vadd.f32 %v684, %v716
          %v733 = vadd.f32 %v685, %v717
          %v734 = vadd.f32 %v686, %v718
          %v735 = vadd.f32 %v687, %v719
          %v736 = vadd.f32 %v688, %v720
          %v737 = vadd.f32 %v689, %v721
          %v738 = vadd.f32 %v690, %v722
          %v739 = vadd.f32 %v691, %v723
          %v740 = vadd.f32 %v692, %v724
          %v741 = vadd.f32 %v693, %v725
          %v742 = vadd.f32 %v694, %v726
          %v743 = vpack.c.bf16 %v728, %v727
          %v744 = vpack.c.bf16 %v730, %v729
          %v745 = vpack.c.bf16 %v732, %v731
          %v746 = vpack.c.bf16 %v734, %v733
          %v747 = vpack.c.bf16 %v736, %v735
          %v748 = vpack.c.bf16 %v738, %v737
          %v749 = vpack.c.bf16 %v740, %v739
          %v750 = vpack.c.bf16 %v742, %v741
          %s751 = sadd.s32 %s662, %s261
          %s752 = sshra.s32 %s751, 4
          %s753 = sand.u32 %s751, 15
          %s754 = smul.addr %s752, 8
          %s755 = scalar_lea.vmem [#allocation2], %s754
          %756 = vst [vmem:[%s755] sm:$0xff] %v743
          %757 = vst [vmem:[%s755 + $0x8] sm:$0xff] %v744
          %758 = vst [vmem:[%s755 + $0x10] sm:$0xff] %v745
          %759 = vst [vmem:[%s755 + $0x18] sm:$0xff] %v746
          %760 = vst [vmem:[%s755 + $0x20] sm:$0xff] %v747
          %761 = vst [vmem:[%s755 + $0x28] sm:$0xff] %v748
          %762 = vst [vmem:[%s755 + $0x30] sm:$0xff] %v749
          %763 = vst [vmem:[%s755 + $0x38] sm:$0xff] %v750
          %p764 = scmp.eq.s32.totalorder %s24, 2
          // Predicated region
          $region57: #{tpu_custom_call.1} parent=55 // pred_check
            %p765 = pneg %p764
          $region58: #{tpu_custom_call.1} parent=55 // pred_check_branch
            %767 = sbr.rel (%p765) target = $region60
          $region59: #{tpu_custom_call.1} parent=55 // pred_region
            %768 = vst [vmem:[%s252] sm:$0xff] %v727
            %769 = vst [vmem:[%s252 + $0x8] sm:$0xff] %v728
            %770 = vst [vmem:[%s252 + $0x10] sm:$0xff] %v729
            %771 = vst [vmem:[%s252 + $0x18] sm:$0xff] %v730
            %772 = vst [vmem:[%s252 + $0x20] sm:$0xff] %v731
            %773 = vst [vmem:[%s252 + $0x28] sm:$0xff] %v732
            %774 = vst [vmem:[%s252 + $0x30] sm:$0xff] %v733
            %775 = vst [vmem:[%s252 + $0x38] sm:$0xff] %v734
            %776 = vst [vmem:[%s252 + $0x40] sm:$0xff] %v735
            %777 = vst [vmem:[%s252 + $0x48] sm:$0xff] %v736
            %778 = vst [vmem:[%s252 + $0x50] sm:$0xff] %v737
            %779 = vst [vmem:[%s252 + $0x58] sm:$0xff] %v738
            %780 = vst [vmem:[%s252 + $0x60] sm:$0xff] %v739
            %781 = vst [vmem:[%s252 + $0x68] sm:$0xff] %v740
            %782 = vst [vmem:[%s252 + $0x70] sm:$0xff] %v741
            %783 = vst [vmem:[%s252 + $0x78] sm:$0xff] %v742
          $region60: #{tpu_custom_call.1} parent=55 // pred_fallthru
            _
        $region56: #{tpu_custom_call.1} parent=31 // pred_fallthru
          _
        %s784 = sand.u32 %s127, 1
        %s785 = scalar_lea.sflag [#allocation6], %s784
        %s786 = sand.u32 %s127, 1
        %s787 = smul.addr %s786, 128
        %s788 = scalar_lea.vmem [#allocation10], %s787
        // Predicated region
        $region61: #{tpu_custom_call.1} parent=31 // pred_check
          %p789 = pneg %p137
        $region62: #{tpu_custom_call.1} parent=31 // pred_check_branch
          %791 = sbr.rel (%p789) target = $region64
        $region63: #{tpu_custom_call.1} parent=31 // pred_region
          %p792 = scmp.eq.s32.totalorder %s24, 2
          %s793 = scalar_select %p792, %s25, 0
          %s794 = smul.u32 16, %s793
          %s796 = ssub.s32 2048, 2048
          %797 = vsyncadd %s785, %s796
          %s798 = smul.addr %s794, 128
          %s799 = scalar_lea.hbm %s3, %s798
          %s800 = sshll.u32 %s788, 4
          %s801 = int_to_ptr.vmem [resolvable:$true] %s800
          %806 = dma.vmem_to_hbm [thread:$0]  %s801, 2048, %s799, %s785, 128, 128, 8
        $region64: #{tpu_custom_call.1} parent=31 // pred_fallthru
          _
      $region32: #{tpu_custom_call.1} parent=5 // pred_fallthru
        _
      %p807 = scmp.le.s32.totalorder 2, %s14
      // Predicated region
      $region65: #{tpu_custom_call.1} parent=5 // pred_check
        %p808 = pneg %p807
      $region66: #{tpu_custom_call.1} parent=5 // pred_check_branch
        %810 = sbr.rel (%p808) target = $region68
      $region67: #{tpu_custom_call.1} parent=5 // pred_region
        %s811 = ssub.s32 %s14, 2
        // Predicated region
        $region69: #{tpu_custom_call.1} parent=67 // pred_check
          %p812 = pneg %p143
        $region70: #{tpu_custom_call.1} parent=67 // pred_check_branch
          %814 = sbr.rel (%p812) target = $region72
        $region71: #{tpu_custom_call.1} parent=67 // pred_region
          %s815 = sand.u32 %s128, 1
          %s816 = scalar_lea.sflag [#allocation6], %s815
          %s817 = sand.u32 %s128, 1
          %s818 = smul.addr %s817, 128
          %s819 = scalar_lea.vmem [#allocation10], %s818
          %820 = dma.done %s816, 2048
        $region72: #{tpu_custom_call.1} parent=67 // pred_fallthru
          _
      $region68: #{tpu_custom_call.1} parent=5 // pred_fallthru
        _
    $region6: #{tpu_custom_call.1} parent=1 // loop_footer
      %s18 = sadd.s32 1, %s14
    $region7: #{tpu_custom_call.1} parent=1 // loop_footer_branch
      %13 = sbr.rel target = $region3
    $region8: #{tpu_custom_call.1} parent=1 // loop_exit
      _
    %821 = vsyncpa [#allocation5], 1
    %s822 = scalar_lea.sflag [#allocation5], 1
    %823 = vsyncpa %s822, 1
    %824 = vsyncpa [#allocation8], 1
    %825 = vsyncpa [#allocation6], 1
    %s826 = scalar_lea.sflag [#allocation6], 1
    %827 = vsyncpa %s826, 1

</llo_original>
